<compile_context>
chip_gen: v6e
topology: v6e:2x2x1
jax: 0.10.0
libtpu: 0.0.40
codegen_flags: <defaults>
</compile_context>

<pallas_src>
import functools

import jax
import jax.numpy as jnp
from jax.experimental import pallas as pl
from jax.experimental.pallas import tpu as pltpu

HIDDEN1 = 64
HIDDEN2 = 32
LANE = 128          # output class axis padded to this many lanes (lane-dense stores)
BATCH_TILE = 128    # rows per grid step


def _round_up(n, m):
    return ((n + m - 1) // m) * m


def _mlp_softmax_kernel(x_ref, w1_ref, b1_ref, w2_ref, b2_ref, w3_ref, b3_ref, o_ref):
    """Fused MLP + softmax over the (lane-padded) class axis for one batch tile."""
    # Linear(input_size, 64) + ReLU   (bf16 MXU operands, f32 accumulate)
    h1 = jnp.dot(x_ref[...], w1_ref[...], preferred_element_type=jnp.float32) + b1_ref[...]
    h1 = jnp.maximum(h1, 0.0)

    # Linear(64, 32) + ReLU
    h2 = jnp.dot(h1.astype(w2_ref.dtype), w2_ref[...],
                 preferred_element_type=jnp.float32) + b2_ref[...]
    h2 = jnp.maximum(h2, 0.0)

    # Linear(32, output_size_padded). Padded columns have weight 0 and bias -1e30.
    logits = jnp.dot(h2.astype(w3_ref.dtype), w3_ref[...],
                     preferred_element_type=jnp.float32) + b3_ref[...]

    # Numerically stable softmax over dim=1; padded columns give exp(-huge) == 0,
    # so the result over the real columns is unchanged.
    m = jnp.max(logits, axis=1, keepdims=True)
    e = jnp.exp(logits - m)
    inv = pl.reciprocal(jnp.sum(e, axis=1, keepdims=True), approx=True)  # EUP slot
    o_ref[...] = (e * inv).astype(o_ref.dtype)


@functools.partial(jax.jit, static_argnames=("out_size",))
def simple_model_forward(x, w1, b1, w2, b2, w3p, b3p, *, out_size):
    batch, in_size = x.shape
    h1 = w1.shape[1]
    h2 = w2.shape[1]
    out_pad = w3p.shape[1]

    tb = min(BATCH_TILE, batch)
    grid = (pl.cdiv(batch, tb),)

    # bf16 MXU operands; biases stay f32 (all elementwise math is f32 in-kernel).
    xb = x.astype(jnp.bfloat16)
    w1b = w1.astype(jnp.bfloat16)
    w2b = w2.astype(jnp.bfloat16)
    w3b = w3p.astype(jnp.bfloat16)

    out_padded = pl.pallas_call(
        _mlp_softmax_kernel,
        out_shape=jax.ShapeDtypeStruct((batch, out_pad), jnp.float32),
        grid=grid,
        in_specs=[
            pl.BlockSpec((tb, in_size), lambda i: (i, 0)),   # x: tiled over batch, pipelined
            pl.BlockSpec((in_size, h1), lambda i: (0, 0)),   # weights/biases: VMEM-resident
            pl.BlockSpec((1, h1), lambda i: (0, 0)),
            pl.BlockSpec((h1, h2), lambda i: (0, 0)),
            pl.BlockSpec((1, h2), lambda i: (0, 0)),
            pl.BlockSpec((h2, out_pad), lambda i: (0, 0)),
            pl.BlockSpec((1, out_pad), lambda i: (0, 0)),
        ],
        out_specs=pl.BlockSpec((tb, out_pad), lambda i: (i, 0)),  # lane-dense (128) stores
        compiler_params=pltpu.CompilerParams(
            dimension_semantics=("parallel",)),  # shard batch tiles across TCs on v7x
    )(xb, w1b, b1, w2b, b2, w3b, b3p)

    return out_padded[:, :out_size]


def init_params(key, input_size, output_size):
    """Deterministic init mirroring nn.Linear shapes (weights stored as [in, out])."""
    k1, k2, k3, k4, k5, k6 = jax.random.split(key, 6)

    def uniform(k, shape, fan_in):
        bound = 1.0 / jnp.sqrt(fan_in)
        return jax.random.uniform(k, shape, jnp.float32, -bound, bound)

    w1 = uniform(k1, (input_size, HIDDEN1), input_size)
    b1 = uniform(k2, (1, HIDDEN1), input_size)
    w2 = uniform(k3, (HIDDEN1, HIDDEN2), HIDDEN1)
    b2 = uniform(k4, (1, HIDDEN2), HIDDEN1)
    w3 = uniform(k5, (HIDDEN2, output_size), HIDDEN2)
    b3 = uniform(k6, (1, output_size), HIDDEN2)
    return w1, b1, w2, b2, w3, b3


def pad_output_params(w3, b3, lane=LANE):
    """Pad the last Linear to a lane-dense (multiple-of-128) class axis.

    Padded weight columns are 0 and padded biases are -1e30, so softmax over the
    padded slab equals softmax over the real out_size columns.
    """
    out_size = w3.shape[1]
    out_pad = max(lane, _round_up(out_size, lane))
    w3p = jnp.zeros((w3.shape[0], out_pad), jnp.float32).at[:, :out_size].set(w3)
    b3p = jnp.full((1, out_pad), -1e30, jnp.float32).at[:, :out_size].set(b3)
    return w3p, b3p


def reference_forward(x, w1, b1, w2, b2, w3, b3):
    """Pure-JAX reference with the same bf16 MXU-operand rounding as the kernel."""
    def q(v):  # emulate the bf16 operand cast (accumulation stays f32)
        return v.astype(jnp.bfloat16).astype(jnp.float32)

    h1 = jnp.maximum(q(x) @ q(w1) + b1, 0.0)
    h2 = jnp.maximum(q(h1) @ q(w2) + b2, 0.0)
    logits = q(h2) @ q(w3) + b3
    return jax.nn.softmax(logits, axis=1)


if __name__ == "__main__":
    # Diabetes-style tabular task: 8 input features, 2 output classes.
    input_size, output_size, batch = 8, 2, 256

    key = jax.random.PRNGKey(0)
    kx, kp = jax.random.split(key)
    x = jax.random.normal(kx, (batch, input_size), jnp.float32)
    w1, b1, w2, b2, w3, b3 = init_params(kp, input_size, output_size)
    w3p, b3p = pad_output_params(w3, b3)

    out = simple_model_forward(x, w1, b1, w2, b2, w3p, b3p, out_size=output_size)
    out = jax.block_until_ready(out)

    ref = reference_forward(x, w1, b1, w2, b2, w3, b3)
    assert out.shape == (batch, output_size), out.shape
    assert jnp.allclose(out, ref, atol=5e-3, rtol=5e-3), "mismatch vs reference"
    assert jnp.allclose(jnp.sum(out, axis=1), 1.0, atol=5e-3), "softmax rows must sum to 1"

    print("KERNEL_OK")
</pallas_src>

<mosaic_0001>
module attributes {stable_mosaic.version = 11 : i64} {
  func.func @_mlp_softmax_kernel(%arg0: i32, %arg1: memref<128x8xbf16, #tpu.memory_space<vmem>>, %arg2: memref<8x64xbf16, #tpu.memory_space<vmem>>, %arg3: memref<1x64xf32, #tpu.memory_space<vmem>>, %arg4: memref<64x32xbf16, #tpu.memory_space<vmem>>, %arg5: memref<1x32xf32, #tpu.memory_space<vmem>>, %arg6: memref<32x128xbf16, #tpu.memory_space<vmem>>, %arg7: memref<1x128xf32, #tpu.memory_space<vmem>>, %arg8: memref<128x128xf32, #tpu.memory_space<vmem>>) attributes {dimension_semantics = [#tpu.dimension_semantics<parallel>], iteration_bounds = array<i64: 2>, scalar_prefetch = 0 : i64, scratch_operands = 0 : i64, tpu.core_type = #tpu.core_type<tc>, window_params = [{transform_indices = @transform_0, window_bounds = array<i64: 128, 8>}, {pipeline_mode = #tpu.pipeline_mode<synchronous>, transform_indices = @transform_1, window_bounds = array<i64: 8, 64>}, {pipeline_mode = #tpu.pipeline_mode<synchronous>, transform_indices = @transform_2, window_bounds = array<i64: 1, 64>}, {pipeline_mode = #tpu.pipeline_mode<synchronous>, transform_indices = @transform_3, window_bounds = array<i64: 64, 32>}, {pipeline_mode = #tpu.pipeline_mode<synchronous>, transform_indices = @transform_4, window_bounds = array<i64: 1, 32>}, {pipeline_mode = #tpu.pipeline_mode<synchronous>, transform_indices = @transform_5, window_bounds = array<i64: 32, 128>}, {pipeline_mode = #tpu.pipeline_mode<synchronous>, transform_indices = @transform_6, window_bounds = array<i64: 1, 128>}, {transform_indices = @transform_7, window_bounds = array<i64: 128, 128>}]} {
    %c0 = arith.constant 0 : index
    %c0_0 = arith.constant 0 : index
    %0 = vector.load %arg1[%c0, %c0_0] : memref<128x8xbf16, #tpu.memory_space<vmem>>, vector<128x8xbf16>
    %c0_1 = arith.constant 0 : index
    %c0_2 = arith.constant 0 : index
    %1 = vector.load %arg2[%c0_1, %c0_2] : memref<8x64xbf16, #tpu.memory_space<vmem>>, vector<8x64xbf16>
    %cst = arith.constant dense<0.000000e+00> : vector<128x64xf32>
    %2 = tpu.matmul %0, %1, %cst {dimension_numbers = #tpu.dot_dimension_numbers<[1], [0], [0], [1], [0, 0, 1, 1], [], []>} : vector<128x8xbf16>, vector<8x64xbf16>, vector<128x64xf32> -> vector<128x64xf32>
    %c0_3 = arith.constant 0 : index
    %c0_4 = arith.constant 0 : index
    %3 = vector.load %arg3[%c0_3, %c0_4] : memref<1x64xf32, #tpu.memory_space<vmem>>, vector<1x64xf32>
    %4 = vector.broadcast %3 : vector<1x64xf32> to vector<128x64xf32>
    %5 = arith.addf %2, %4 : vector<128x64xf32>
    %cst_5 = arith.constant 0.000000e+00 : f32
    %6 = vector.broadcast %cst_5 : f32 to vector<128x64xf32>
    %7 = arith.maximumf %5, %6 : vector<128x64xf32>
    %8 = arith.truncf %7 : vector<128x64xf32> to vector<128x64xbf16>
    %c0_6 = arith.constant 0 : index
    %c0_7 = arith.constant 0 : index
    %9 = vector.load %arg4[%c0_6, %c0_7] : memref<64x32xbf16, #tpu.memory_space<vmem>>, vector<64x32xbf16>
    %cst_8 = arith.constant dense<0.000000e+00> : vector<128x32xf32>
    %10 = tpu.matmul %8, %9, %cst_8 {dimension_numbers = #tpu.dot_dimension_numbers<[1], [0], [0], [1], [0, 0, 1, 1], [], []>} : vector<128x64xbf16>, vector<64x32xbf16>, vector<128x32xf32> -> vector<128x32xf32>
    %c0_9 = arith.constant 0 : index
    %c0_10 = arith.constant 0 : index
    %11 = vector.load %arg5[%c0_9, %c0_10] : memref<1x32xf32, #tpu.memory_space<vmem>>, vector<1x32xf32>
    %12 = vector.broadcast %11 : vector<1x32xf32> to vector<128x32xf32>
    %13 = arith.addf %10, %12 : vector<128x32xf32>
    %cst_11 = arith.constant 0.000000e+00 : f32
    %14 = vector.broadcast %cst_11 : f32 to vector<128x32xf32>
    %15 = arith.maximumf %13, %14 : vector<128x32xf32>
    %16 = arith.truncf %15 : vector<128x32xf32> to vector<128x32xbf16>
    %c0_12 = arith.constant 0 : index
    %c0_13 = arith.constant 0 : index
    %17 = vector.load %arg6[%c0_12, %c0_13] : memref<32x128xbf16, #tpu.memory_space<vmem>>, vector<32x128xbf16>
    %cst_14 = arith.constant dense<0.000000e+00> : vector<128x128xf32>
    %18 = tpu.matmul %16, %17, %cst_14 {dimension_numbers = #tpu.dot_dimension_numbers<[1], [0], [0], [1], [0, 0, 1, 1], [], []>} : vector<128x32xbf16>, vector<32x128xbf16>, vector<128x128xf32> -> vector<128x128xf32>
    %c0_15 = arith.constant 0 : index
    %c0_16 = arith.constant 0 : index
    %19 = vector.load %arg7[%c0_15, %c0_16] : memref<1x128xf32, #tpu.memory_space<vmem>>, vector<1x128xf32>
    %20 = vector.broadcast %19 : vector<1x128xf32> to vector<128x128xf32>
    %21 = arith.addf %18, %20 : vector<128x128xf32>
    %cst_17 = arith.constant dense<0xFF800000> : vector<128xf32>
    %22 = vector.multi_reduction <maximumf>, %21, %cst_17 [1] : vector<128x128xf32> to vector<128xf32>
    %23 = vector.shape_cast %22 : vector<128xf32> to vector<128x1xf32>
    %24 = vector.broadcast %23 : vector<128x1xf32> to vector<128x128xf32>
    %25 = arith.subf %21, %24 : vector<128x128xf32>
    %26 = math.exp %25 : vector<128x128xf32>
    %cst_18 = arith.constant dense<0.000000e+00> : vector<128xf32>
    %27 = vector.multi_reduction <add>, %26, %cst_18 [1] : vector<128x128xf32> to vector<128xf32>
    %28 = vector.shape_cast %27 : vector<128xf32> to vector<128x1xf32>
    %29 = tpu.reciprocal %28 {approx = true} : vector<128x1xf32> -> vector<128x1xf32>
    %30 = vector.broadcast %29 : vector<128x1xf32> to vector<128x128xf32>
    %31 = arith.mulf %26, %30 : vector<128x128xf32>
    %c0_19 = arith.constant 0 : index
    %c0_20 = arith.constant 0 : index
    %32 = vector.load %arg8[%c0_19, %c0_20] : memref<128x128xf32, #tpu.memory_space<vmem>>, vector<128x128xf32>
    tpu.vector_store %arg8[%c0_19, %c0_20], %31 {strides = array<i32>} : memref<128x128xf32, #tpu.memory_space<vmem>>, vector<128x128xf32>,
    return
  }
  func.func @transform_0(%arg0: i32) -> (i32, i32) {
    %c0_i32 = arith.constant 0 : i32
    %c0_i32_0 = arith.constant 0 : i32
    return %arg0, %c0_i32 : i32, i32
  }
  func.func @transform_1(%arg0: i32) -> (i32, i32) {
    %c0_i32 = arith.constant 0 : i32
    %c0_i32_0 = arith.constant 0 : i32
    %c0_i32_1 = arith.constant 0 : i32
    return %c0_i32, %c0_i32_0 : i32, i32
  }
  func.func @transform_2(%arg0: i32) -> (i32, i32) {
    %c0_i32 = arith.constant 0 : i32
    %c0_i32_0 = arith.constant 0 : i32
    %c0_i32_1 = arith.constant 0 : i32
    return %c0_i32, %c0_i32_0 : i32, i32
  }
  func.func @transform_3(%arg0: i32) -> (i32, i32) {
    %c0_i32 = arith.constant 0 : i32
    %c0_i32_0 = arith.constant 0 : i32
    %c0_i32_1 = arith.constant 0 : i32
    return %c0_i32, %c0_i32_0 : i32, i32
  }
  func.func @transform_4(%arg0: i32) -> (i32, i32) {
    %c0_i32 = arith.constant 0 : i32
    %c0_i32_0 = arith.constant 0 : i32
    %c0_i32_1 = arith.constant 0 : i32
    return %c0_i32, %c0_i32_0 : i32, i32
  }
  func.func @transform_5(%arg0: i32) -> (i32, i32) {
    %c0_i32 = arith.constant 0 : i32
    %c0_i32_0 = arith.constant 0 : i32
    %c0_i32_1 = arith.constant 0 : i32
    return %c0_i32, %c0_i32_0 : i32, i32
  }
  func.func @transform_6(%arg0: i32) -> (i32, i32) {
    %c0_i32 = arith.constant 0 : i32
    %c0_i32_0 = arith.constant 0 : i32
    %c0_i32_1 = arith.constant 0 : i32
    return %c0_i32, %c0_i32_0 : i32, i32
  }
  func.func @transform_7(%arg0: i32) -> (i32, i32) {
    %c0_i32 = arith.constant 0 : i32
    %c0_i32_0 = arith.constant 0 : i32
    return %arg0, %c0_i32 : i32, i32
  }
}

</mosaic_0001>

<llo_original>
// kernel: simple_model_forward.1
$region0: #{simple_model_forward.1}
  #allocation0 [shape = 'u32[]', space=smem, size = 0x4, offset = 0x4, fixed_abs, tag = 'smem constant byte address 0x4 - core index']
  #allocation1 [shape = 'u32[144,128]{1,0:T(1,128)}', space=vmem, size = 0x12000, scoped, tag = 'internal scratch']
  %s0 = inlined_call_operand.vmem [shape: bf16[256,8], index: 0, kind: input, shape index: {}]
  %s1 = inlined_call_operand.vmem [shape: bf16[8,64], index: 1, kind: input, shape index: {}]
  %s2 = inlined_call_operand.vmem [shape: f32[1,64], index: 2, kind: input, shape index: {}]
  %s3 = inlined_call_operand.vmem [shape: bf16[64,32], index: 3, kind: input, shape index: {}]
  %s4 = inlined_call_operand.vmem [shape: f32[1,32], index: 4, kind: input, shape index: {}]
  %s5 = inlined_call_operand.vmem [shape: bf16[32,128], index: 5, kind: input, shape index: {}]
  %s6 = inlined_call_operand.vmem [shape: f32[1,128], index: 6, kind: input, shape index: {}]
  %s7 = inlined_call_operand.vmem [shape: f32[256,128], index: 7, kind: output, shape index: {}]
  %s8 = sld [smem:[#allocation0]]
  $region61: #{simple_model_forward.1} parent=0
    _
  %s10 = ssub.s32 1, %s8
  %s11 = scalar_select 0, %s10, %s8
  loop: start=0, step=1, limit=4
  $region2: #{simple_model_forward.1} parent=0 // loop_pre_header
    _
  $region3: #{simple_model_forward.1} parent=0 // loop_header
    %s13 = sphi 0, %s17
    %p14 = scmp.ge.s32.totalorder %s13, 4
    %s23 = sphi 0, %s25
    %s26 = sphi 0, %s23
    %s27 = sphi 0, %s26
    %s43 = sphi 0, %s27
    %s47 = sphi 0, %s47
    %s49 = sphi 0, %s47
    %s50 = sphi 0, %s49
    %s64 = sphi 0, %s50
    %s68 = sphi 0, %s68
    %s70 = sphi 0, %s68
    %s71 = sphi 0, %s70
    %s85 = sphi 0, %s71
    %s89 = sphi 0, %s89
    %s91 = sphi 0, %s89
    %s92 = sphi 0, %s91
    %s106 = sphi 0, %s92
    %s110 = sphi 0, %s110
    %s112 = sphi 0, %s110
    %s113 = sphi 0, %s112
    %s127 = sphi 0, %s113
    %s131 = sphi 0, %s131
    %s133 = sphi 0, %s131
    %s134 = sphi 0, %s133
    %s148 = sphi 0, %s134
    %s152 = sphi 0, %s152
    %s154 = sphi 0, %s152
    %s155 = sphi 0, %s154
    %s169 = sphi 0, %s155
    %s175 = sphi 0, %s177
    %s178 = sphi 0, %s175
    %s179 = sphi 0, %s178
    %s195 = sphi 0, %s179
  $region4: #{simple_model_forward.1} parent=0 // loop_header_branch
    %16 = sbr.rel (%p14) target = $region8
  $region5: #{simple_model_forward.1} parent=0 // loop_body
    %s18 = ssub.s32 %s13, 1
    %s19 = ssub.s32 %s13, 2
    %s20 = sadd.s32 %s13, 1
    %s21 = ssub.s32 %s13, %s20
    %p22 = scmp.eq.s32.totalorder %s21, 0
    %s24 = sadd.s32 %s23, 1
    %s25 = scalar_select %p22, %s23, %s24
    %p28 = pneg %p22
    %p29 = scmp.eq.s32.totalorder %s13, 1
    %p30 = por %p28, %p29
    %p31 = scmp.ne.s32.totalorder %s23, %s26
    %p32 = scmp.eq.s32.totalorder %s13, 0
    %p33 = por %p31, %p32
    %p34 = scmp.ne.s32.totalorder %s23, %s26
    %p35 = scmp.eq.s32.totalorder %s18, 1
    %p36 = por %p34, %p35
    %p37 = scmp.ne.s32.totalorder %s26, %s27
    %p38 = scmp.eq.s32.totalorder %s18, 0
    %p39 = por %p37, %p38
    %p40 = scmp.ne.s32.totalorder %s26, %s27
    %p41 = scmp.eq.s32.totalorder %s19, 1
    %p42 = por %p40, %p41
    %p44 = scmp.ne.s32.totalorder %s27, %s43
    %p45 = scmp.eq.s32.totalorder %s19, 0
    %p46 = por %p44, %p45
    %s48 = sadd.s32 %s47, 1
    %p51 = scmp.eq.s32.totalorder %s13, 1
    %p52 = scmp.ne.s32.totalorder %s47, %s49
    %p53 = scmp.eq.s32.totalorder %s13, 0
    %p54 = por %p52, %p53
    %p55 = scmp.ne.s32.totalorder %s47, %s49
    %p56 = scmp.eq.s32.totalorder %s18, 1
    %p57 = por %p55, %p56
    %p58 = scmp.ne.s32.totalorder %s49, %s50
    %p59 = scmp.eq.s32.totalorder %s18, 0
    %p60 = por %p58, %p59
    %p61 = scmp.ne.s32.totalorder %s49, %s50
    %p62 = scmp.eq.s32.totalorder %s19, 1
    %p63 = por %p61, %p62
    %p65 = scmp.ne.s32.totalorder %s50, %s64
    %p66 = scmp.eq.s32.totalorder %s19, 0
    %p67 = por %p65, %p66
    %s69 = sadd.s32 %s68, 1
    %p72 = scmp.eq.s32.totalorder %s13, 1
    %p73 = scmp.ne.s32.totalorder %s68, %s70
    %p74 = scmp.eq.s32.totalorder %s13, 0
    %p75 = por %p73, %p74
    %p76 = scmp.ne.s32.totalorder %s68, %s70
    %p77 = scmp.eq.s32.totalorder %s18, 1
    %p78 = por %p76, %p77
    %p79 = scmp.ne.s32.totalorder %s70, %s71
    %p80 = scmp.eq.s32.totalorder %s18, 0
    %p81 = por %p79, %p80
    %p82 = scmp.ne.s32.totalorder %s70, %s71
    %p83 = scmp.eq.s32.totalorder %s19, 1
    %p84 = por %p82, %p83
    %p86 = scmp.ne.s32.totalorder %s71, %s85
    %p87 = scmp.eq.s32.totalorder %s19, 0
    %p88 = por %p86, %p87
    %s90 = sadd.s32 %s89, 1
    %p93 = scmp.eq.s32.totalorder %s13, 1
    %p94 = scmp.ne.s32.totalorder %s89, %s91
    %p95 = scmp.eq.s32.totalorder %s13, 0
    %p96 = por %p94, %p95
    %p97 = scmp.ne.s32.totalorder %s89, %s91
    %p98 = scmp.eq.s32.totalorder %s18, 1
    %p99 = por %p97, %p98
    %p100 = scmp.ne.s32.totalorder %s91, %s92
    %p101 = scmp.eq.s32.totalorder %s18, 0
    %p102 = por %p100, %p101
    %p103 = scmp.ne.s32.totalorder %s91, %s92
    %p104 = scmp.eq.s32.totalorder %s19, 1
    %p105 = por %p103, %p104
    %p107 = scmp.ne.s32.totalorder %s92, %s106
    %p108 = scmp.eq.s32.totalorder %s19, 0
    %p109 = por %p107, %p108
    %s111 = sadd.s32 %s110, 1
    %p114 = scmp.eq.s32.totalorder %s13, 1
    %p115 = scmp.ne.s32.totalorder %s110, %s112
    %p116 = scmp.eq.s32.totalorder %s13, 0
    %p117 = por %p115, %p116
    %p118 = scmp.ne.s32.totalorder %s110, %s112
    %p119 = scmp.eq.s32.totalorder %s18, 1
    %p120 = por %p118, %p119
    %p121 = scmp.ne.s32.totalorder %s112, %s113
    %p122 = scmp.eq.s32.totalorder %s18, 0
    %p123 = por %p121, %p122
    %p124 = scmp.ne.s32.totalorder %s112, %s113
    %p125 = scmp.eq.s32.totalorder %s19, 1
    %p126 = por %p124, %p125
    %p128 = scmp.ne.s32.totalorder %s113, %s127
    %p129 = scmp.eq.s32.totalorder %s19, 0
    %p130 = por %p128, %p129
    %s132 = sadd.s32 %s131, 1
    %p135 = scmp.eq.s32.totalorder %s13, 1
    %p136 = scmp.ne.s32.totalorder %s131, %s133
    %p137 = scmp.eq.s32.totalorder %s13, 0
    %p138 = por %p136, %p137
    %p139 = scmp.ne.s32.totalorder %s131, %s133
    %p140 = scmp.eq.s32.totalorder %s18, 1
    %p141 = por %p139, %p140
    %p142 = scmp.ne.s32.totalorder %s133, %s134
    %p143 = scmp.eq.s32.totalorder %s18, 0
    %p144 = por %p142, %p143
    %p145 = scmp.ne.s32.totalorder %s133, %s134
    %p146 = scmp.eq.s32.totalorder %s19, 1
    %p147 = por %p145, %p146
    %p149 = scmp.ne.s32.totalorder %s134, %s148
    %p150 = scmp.eq.s32.totalorder %s19, 0
    %p151 = por %p149, %p150
    %s153 = sadd.s32 %s152, 1
    %p156 = scmp.eq.s32.totalorder %s13, 1
    %p157 = scmp.ne.s32.totalorder %s152, %s154
    %p158 = scmp.eq.s32.totalorder %s13, 0
    %p159 = por %p157, %p158
    %p160 = scmp.ne.s32.totalorder %s152, %s154
    %p161 = scmp.eq.s32.totalorder %s18, 1
    %p162 = por %p160, %p161
    %p163 = scmp.ne.s32.totalorder %s154, %s155
    %p164 = scmp.eq.s32.totalorder %s18, 0
    %p165 = por %p163, %p164
    %p166 = scmp.ne.s32.totalorder %s154, %s155
    %p167 = scmp.eq.s32.totalorder %s19, 1
    %p168 = por %p166, %p167
    %p170 = scmp.ne.s32.totalorder %s155, %s169
    %p171 = scmp.eq.s32.totalorder %s19, 0
    %p172 = por %p170, %p171
    %s173 = ssub.s32 %s13, %s20
    %p174 = scmp.eq.s32.totalorder %s173, 0
    %s176 = sadd.s32 %s175, 1
    %s177 = scalar_select %p174, %s175, %s176
    %p180 = pneg %p174
    %p181 = scmp.eq.s32.totalorder %s13, 1
    %p182 = por %p180, %p181
    %p183 = scmp.ne.s32.totalorder %s175, %s178
    %p184 = scmp.eq.s32.totalorder %s13, 0
    %p185 = por %p183, %p184
    %p186 = scmp.ne.s32.totalorder %s175, %s178
    %p187 = scmp.eq.s32.totalorder %s18, 1
    %p188 = por %p186, %p187
    %p189 = scmp.ne.s32.totalorder %s178, %s179
    %p190 = scmp.eq.s32.totalorder %s18, 0
    %p191 = por %p189, %p190
    %p192 = scmp.ne.s32.totalorder %s178, %s179
    %p193 = scmp.eq.s32.totalorder %s19, 1
    %p194 = por %p192, %p193
    %p196 = scmp.ne.s32.totalorder %s179, %s195
    %p197 = scmp.eq.s32.totalorder %s19, 0
    %p198 = por %p196, %p197
    %p199 = scmp.le.s32.totalorder 1, %s13
    %p200 = scmp.lt.s32.totalorder %s13, 3
    %p201 = pnand %p199, %p200
    %p202 = pneg %p201
    // Predicated region
    $region9: #{simple_model_forward.1} parent=5 // pred_check
      _
    $region10: #{simple_model_forward.1} parent=5 // pred_check_branch
      %204 = sbr.rel (%p201) target = $region12
    $region11: #{simple_model_forward.1} parent=5 // pred_region
      %s205 = ssub.s32 %s13, 1
      // Predicated region
      $region13: #{simple_model_forward.1} parent=11 // pred_check
        %p206 = pneg %p60
      $region14: #{simple_model_forward.1} parent=11 // pred_check_branch
        %208 = sbr.rel (%p206) target = $region16
      $region15: #{simple_model_forward.1} parent=11 // pred_region
        _
      $region16: #{simple_model_forward.1} parent=11 // pred_fallthru
        _
      // Predicated region
      $region17: #{simple_model_forward.1} parent=11 // pred_check
        %p209 = pneg %p81
      $region18: #{simple_model_forward.1} parent=11 // pred_check_branch
        %211 = sbr.rel (%p209) target = $region20
      $region19: #{simple_model_forward.1} parent=11 // pred_region
        _
      $region20: #{simple_model_forward.1} parent=11 // pred_fallthru
        _
      // Predicated region
      $region21: #{simple_model_forward.1} parent=11 // pred_check
        %p212 = pneg %p102
      $region22: #{simple_model_forward.1} parent=11 // pred_check_branch
        %214 = sbr.rel (%p212) target = $region24
      $region23: #{simple_model_forward.1} parent=11 // pred_region
        _
      $region24: #{simple_model_forward.1} parent=11 // pred_fallthru
        _
      // Predicated region
      $region25: #{simple_model_forward.1} parent=11 // pred_check
        %p215 = pneg %p123
      $region26: #{simple_model_forward.1} parent=11 // pred_check_branch
        %217 = sbr.rel (%p215) target = $region28
      $region27: #{simple_model_forward.1} parent=11 // pred_region
        _
      $region28: #{simple_model_forward.1} parent=11 // pred_fallthru
        _
      // Predicated region
      $region29: #{simple_model_forward.1} parent=11 // pred_check
        %p218 = pneg %p144
      $region30: #{simple_model_forward.1} parent=11 // pred_check_branch
        %220 = sbr.rel (%p218) target = $region32
      $region31: #{simple_model_forward.1} parent=11 // pred_region
        _
      $region32: #{simple_model_forward.1} parent=11 // pred_fallthru
        _
      // Predicated region
      $region33: #{simple_model_forward.1} parent=11 // pred_check
        %p221 = pneg %p165
      $region34: #{simple_model_forward.1} parent=11 // pred_check_branch
        %223 = sbr.rel (%p221) target = $region36
      $region35: #{simple_model_forward.1} parent=11 // pred_region
        _
      $region36: #{simple_model_forward.1} parent=11 // pred_fallthru
        _
    $region12: #{simple_model_forward.1} parent=5 // pred_fallthru
      _
    %p224 = scmp.lt.s32.totalorder %s13, 2
    // Predicated region
    $region37: #{simple_model_forward.1} parent=5 // pred_check
      %p225 = pneg %p224
    $region38: #{simple_model_forward.1} parent=5 // pred_check_branch
      %227 = sbr.rel (%p225) target = $region40
    $region39: #{simple_model_forward.1} parent=5 // pred_region
      // Predicated region
      $region41: #{simple_model_forward.1} parent=39 // pred_check
        %p228 = pneg %p33
      $region42: #{simple_model_forward.1} parent=39 // pred_check_branch
        %230 = sbr.rel (%p228) target = $region44
      $region43: #{simple_model_forward.1} parent=39 // pred_region
        %s231 = smul.u32 16, %s13
        %p232 = scmp.lt.s32.totalorder %s231, 31
        %s233 = scalar_select %p232, %s231, 31
        %s234 = smul.addr %s233, 4
        %s235 = scalar_lea.vmem %s0, %s234
        %s236 = smul.u32 16, %s13
      $region44: #{simple_model_forward.1} parent=39 // pred_fallthru
        _
    $region40: #{simple_model_forward.1} parent=5 // pred_fallthru
      _
    %p237 = scmp.le.s32.totalorder 1, %s13
    %p238 = scmp.lt.s32.totalorder %s13, 3
    %p239 = pnand %p237, %p238
    %p240 = pneg %p239
    // Predicated region
    $region45: #{simple_model_forward.1} parent=5 // pred_check
      _
    $region46: #{simple_model_forward.1} parent=5 // pred_check_branch
      %242 = sbr.rel (%p239) target = $region48
    $region47: #{simple_model_forward.1} parent=5 // pred_region
      %s243 = ssub.s32 %s13, 1
      %s244 = smul.u32 16, %s18
      %p245 = scmp.lt.s32.totalorder %s244, 31
      %s246 = scalar_select %p245, %s244, 31
      %s247 = smul.addr %s246, 4
      %s248 = scalar_lea.vmem %s0, %s247
      %p249 = pneg %p39
      %p250 = pneg %p36
      %p251 = pneg %p60
      %p252 = pneg %p57
      %p253 = pneg %p81
      %p254 = pneg %p78
      %p255 = pneg %p102
      %p256 = pneg %p99
      %p257 = pneg %p123
      %p258 = pneg %p120
      %p259 = pneg %p144
      %p260 = pneg %p141
      %p261 = pneg %p165
      %p262 = pneg %p162
      %p263 = pneg %p191
      %p264 = pneg %p188
      %s265 = smul.u32 16, %s18
      %p266 = scmp.lt.s32.totalorder %s265, 31
      %s267 = scalar_select %p266, %s265, 31
      %s268 = smul.addr %s267, 8
      %s269 = scalar_lea.vmem %s7, %s268
      %s270 = smul.u32 16, %s18
      %p271 = scmp.lt.s32.totalorder %s270, 31
      %s272 = scalar_select %p271, %s270, 31
      %s273 = smul.addr %s272, 4
      %s274 = scalar_lea.vmem %s0, %s273
      %s275 = smul.u32 16, %s18
      %s276 = smul.u32 16, %s18
      %p277 = scmp.lt.s32.totalorder %s276, 31
      %s278 = scalar_select %p277, %s276, 31
      %s279 = smul.addr %s278, 8
      %s280 = scalar_lea.vmem %s7, %s279
      %s281 = smul.u32 16, %s18
      %v283 = vld [vmem:[%s274] sm:$0xf]
      %v284 = vld [vmem:[%s274 + $0x4] sm:$0xf]
      %v285 = vld [vmem:[%s274 + $0x8] sm:$0xf]
      %v286 = vld [vmem:[%s274 + $0xc] sm:$0xf]
      %v287 = vld [vmem:[%s274 + $0x10] sm:$0xf]
      %v288 = vld [vmem:[%s274 + $0x14] sm:$0xf]
      %v289 = vld [vmem:[%s274 + $0x18] sm:$0xf]
      %v290 = vld [vmem:[%s274 + $0x1c] sm:$0xf]
      %v291 = vld [vmem:[%s274 + $0x20] sm:$0xf]
      %v292 = vld [vmem:[%s274 + $0x24] sm:$0xf]
      %v293 = vld [vmem:[%s274 + $0x28] sm:$0xf]
      %v294 = vld [vmem:[%s274 + $0x2c] sm:$0xf]
      %v295 = vld [vmem:[%s274 + $0x30] sm:$0xf]
      %v296 = vld [vmem:[%s274 + $0x34] sm:$0xf]
      %v297 = vld [vmem:[%s274 + $0x38] sm:$0xf]
      %v298 = vld [vmem:[%s274 + $0x3c] sm:$0xf]
      %v299 = vld [vmem:[%s1] sm:$0xf]
      %v300 = vld [vmem:[%s2] sm:$0x1]
      %v302 = vlaneseq
      %v303 = vshrl.u32 %v302, 7
      %v304 = vsub.s32 0, %v303
      %v305 = vrot.slane %v300, %v304
      %v323 = vunpack.c.l.b16 %v283
      %v324 = vunpack.c.l.b16 %v284
      %v325 = vunpack.c.l.b16 %v285
      %v326 = vunpack.c.l.b16 %v286
      %v327 = vunpack.c.l.b16 %v287
      %v328 = vunpack.c.l.b16 %v288
      %v329 = vunpack.c.l.b16 %v289
      %v330 = vunpack.c.l.b16 %v290
      %v331 = vunpack.c.l.b16 %v291
      %v332 = vunpack.c.l.b16 %v292
      %v333 = vunpack.c.l.b16 %v293
      %v334 = vunpack.c.l.b16 %v294
      %v335 = vunpack.c.l.b16 %v295
      %v336 = vunpack.c.l.b16 %v296
      %v337 = vunpack.c.l.b16 %v297
      %v338 = vunpack.c.l.b16 %v298
      %v339 = vpack.c.b16 %v324, %v323
      %v340 = vpack.c.b16 %v326, %v325
      %v341 = vpack.c.b16 %v328, %v327
      %v342 = vpack.c.b16 %v330, %v329
      %v343 = vpack.c.b16 %v332, %v331
      %v344 = vpack.c.b16 %v334, %v333
      %v345 = vpack.c.b16 %v336, %v335
      %v346 = vpack.c.b16 %v338, %v337
      %vm347 = vcmask 64512
      %v349 = vsel %vm347, %v339, 0
      %v352 = vsel %vm347, %v340, 0
      %v355 = vsel %vm347, %v341, 0
      %v358 = vsel %vm347, %v342, 0
      %v361 = vsel %vm347, %v343, 0
      %v364 = vsel %vm347, %v344, 0
      %v367 = vsel %vm347, %v345, 0
      %v370 = vsel %vm347, %v346, 0
      %vm372 = vcmask 1043456
      %v374 = vsel %vm372, %v299, 0
      %376 = vmatprep.subr.bf16.mxu0 0
      %377 = vmatpush1.bf16.msra.mxu0 0
      %378 = vmatprep.subr.bf16.mxu0 0
      %379 = vmatpush1.bf16.msra.mxu0 0
      %380 = vmatprep.subr.bf16.mxu0 0
      %381 = vmatpush1.bf16.msra.mxu0 0
      %382 = vmatprep.subr.bf16.mxu0 0
      %383 = vmatpush1.bf16.msra.mxu0 0
      %384 = vmatprep.subr.bf16.mxu0 0
      %385 = vmatpush1.bf16.msra.mxu0 0
      %386 = vmatprep.subr.bf16.mxu0 0
      %387 = vmatpush1.bf16.msra.mxu0 0
      %388 = vmatprep.subr.bf16.mxu0 0
      %389 = vmatpush1.bf16.msra.mxu0 0
      %390 = vmatprep.subr.bf16.mxu0 0
      %391 = vmatpush1.bf16.msra.mxu0 %v374
      %392 = vmatprep.subr.bf16.mxu0 0
      %393 = vmatpush2.bf16.msra.mxu0 0
      %394 = vmatprep.subr.bf16.mxu0 0
      %395 = vmatpush2.bf16.msra.mxu0 0
      %396 = vmatprep.subr.bf16.mxu0 0
      %397 = vmatpush2.bf16.msra.mxu0 0
      %398 = vmatprep.subr.bf16.mxu0 0
      %399 = vmatpush2.bf16.msra.mxu0 0
      %400 = vmatprep.subr.bf16.mxu0 0
      %401 = vmatpush2.bf16.msra.mxu0 0
      %402 = vmatprep.subr.bf16.mxu0 0
      %403 = vmatpush2.bf16.msra.mxu0 0
      %404 = vmatprep.subr.bf16.mxu0 0
      %405 = vmatpush2.bf16.msra.mxu0 0
      %406 = vmatprep.subr.bf16.mxu0 0
      %407 = vmatpush2.bf16.msra.mxu0 0
      %408 = vmatprep.mubr.bf16.mxu0 0
      %409 = vmatmul.mubr.bf16.gmra.mxu0 %v349
      %v410 = vpop.f32.mrf.mxu0
      %v411 = vadd.f32 %v305, %v410
      %v412 = vpop.f32.mrf.mxu0
      %v413 = vpop.f32.mrf.mxu0
      %v414 = vadd.f32 %v305, %v413
      %v415 = vpop.f32.mrf.mxu0
      %416 = vmatprep.mubr.bf16.mxu0 0
      %417 = vmatmul.mubr.bf16.gmra.mxu0 %v352
      %v418 = vpop.f32.mrf.mxu0
      %v419 = vadd.f32 %v305, %v418
      %v420 = vpop.f32.mrf.mxu0
      %v421 = vpop.f32.mrf.mxu0
      %v422 = vadd.f32 %v305, %v421
      %v423 = vpop.f32.mrf.mxu0
      %424 = vmatprep.mubr.bf16.mxu0 0
      %425 = vmatmul.mubr.bf16.gmra.mxu0 %v355
      %v426 = vpop.f32.mrf.mxu0
      %v427 = vadd.f32 %v305, %v426
      %v428 = vpop.f32.mrf.mxu0
      %v429 = vpop.f32.mrf.mxu0
      %v430 = vadd.f32 %v305, %v429
      %v431 = vpop.f32.mrf.mxu0
      %432 = vmatprep.mubr.bf16.mxu0 0
      %433 = vmatmul.mubr.bf16.gmra.mxu0 %v358
      %v434 = vpop.f32.mrf.mxu0
      %v435 = vadd.f32 %v305, %v434
      %v436 = vpop.f32.mrf.mxu0
      %v437 = vpop.f32.mrf.mxu0
      %v438 = vadd.f32 %v305, %v437
      %v439 = vpop.f32.mrf.mxu0
      %440 = vmatprep.mubr.bf16.mxu0 0
      %441 = vmatmul.mubr.bf16.gmra.mxu0 %v361
      %v442 = vpop.f32.mrf.mxu0
      %v443 = vadd.f32 %v305, %v442
      %v444 = vpop.f32.mrf.mxu0
      %v445 = vpop.f32.mrf.mxu0
      %v446 = vadd.f32 %v305, %v445
      %v447 = vpop.f32.mrf.mxu0
      %448 = vmatprep.mubr.bf16.mxu0 0
      %449 = vmatmul.mubr.bf16.gmra.mxu0 %v364
      %v450 = vpop.f32.mrf.mxu0
      %v451 = vadd.f32 %v305, %v450
      %v452 = vpop.f32.mrf.mxu0
      %v453 = vpop.f32.mrf.mxu0
      %v454 = vadd.f32 %v305, %v453
      %v455 = vpop.f32.mrf.mxu0
      %456 = vmatprep.mubr.bf16.mxu0 0
      %457 = vmatmul.mubr.bf16.gmra.mxu0 %v367
      %v458 = vpop.f32.mrf.mxu0
      %v459 = vadd.f32 %v305, %v458
      %v460 = vpop.f32.mrf.mxu0
      %v461 = vpop.f32.mrf.mxu0
      %v462 = vadd.f32 %v305, %v461
      %v463 = vpop.f32.mrf.mxu0
      %464 = vmatprep.mubr.bf16.mxu0 0
      %465 = vmatmul.mubr.bf16.gmra.mxu0 %v370
      %v466 = vpop.f32.mrf.mxu0
      %v467 = vadd.f32 %v305, %v466
      %v468 = vpop.f32.mrf.mxu0
      %v469 = vpop.f32.mrf.mxu0
      %v470 = vadd.f32 %v305, %v469
      %v471 = vpop.f32.mrf.mxu0
      %472 = vdwg.mxu0
      %v473 = vmax.f32 %v411, 0.0
      %v474 = vmax.f32 %v414, 0.0
      %v475 = vmax.f32 %v419, 0.0
      %v476 = vmax.f32 %v422, 0.0
      %v477 = vmax.f32 %v427, 0.0
      %v478 = vmax.f32 %v430, 0.0
      %v479 = vmax.f32 %v435, 0.0
      %v480 = vmax.f32 %v438, 0.0
      %v481 = vmax.f32 %v443, 0.0
      %v482 = vmax.f32 %v446, 0.0
      %v483 = vmax.f32 %v451, 0.0
      %v484 = vmax.f32 %v454, 0.0
      %v485 = vmax.f32 %v459, 0.0
      %v486 = vmax.f32 %v462, 0.0
      %v487 = vmax.f32 %v467, 0.0
      %v488 = vmax.f32 %v470, 0.0
      %v489 = vpack.c.bf16 %v474, %v473
      %v490 = vpack.c.bf16 %v476, %v475
      %v491 = vpack.c.bf16 %v478, %v477
      %v492 = vpack.c.bf16 %v480, %v479
      %v493 = vpack.c.bf16 %v482, %v481
      %v494 = vpack.c.bf16 %v484, %v483
      %v495 = vpack.c.bf16 %v486, %v485
      %v496 = vpack.c.bf16 %v488, %v487
      %v497 = vld [vmem:[%s3] sm:$0xf]
      %v498 = vld [vmem:[%s3 + $0x4] sm:$0xf]
      %v499 = vld [vmem:[%s3 + $0x8] sm:$0xf]
      %v500 = vld [vmem:[%s3 + $0xc] sm:$0xf]
      %v501 = vld [vmem:[%s3 + $0x10] sm:$0xf]
      %v502 = vld [vmem:[%s3 + $0x14] sm:$0xf]
      %v503 = vld [vmem:[%s3 + $0x18] sm:$0xf]
      %v504 = vld [vmem:[%s3 + $0x1c] sm:$0xf]
      %v505 = vld [vmem:[%s4] sm:$0x1]
      %v507 = vlaneseq
      %v508 = vshrl.u32 %v507, 7
      %v509 = vsub.s32 0, %v508
      %v510 = vrot.slane %v505, %v509
      %v520 = vunpack.c.l.b16 %v497
      %v521 = vunpack.c.l.b16 %v498
      %v522 = vunpack.c.l.b16 %v499
      %v523 = vunpack.c.l.b16 %v500
      %v524 = vunpack.c.l.b16 %v501
      %v525 = vunpack.c.l.b16 %v502
      %v526 = vunpack.c.l.b16 %v503
      %v527 = vunpack.c.l.b16 %v504
      %v528 = vpack.c.b16 %v521, %v520
      %v529 = vpack.c.b16 %v523, %v522
      %v530 = vpack.c.b16 %v525, %v524
      %v531 = vpack.c.b16 %v527, %v526
      %vm536 = vcmask 523264
      %v538 = vsel %vm536, %v489, 0
      %v541 = vsel %vm536, %v490, 0
      %v544 = vsel %vm536, %v491, 0
      %v547 = vsel %vm536, %v492, 0
      %v550 = vsel %vm536, %v493, 0
      %v553 = vsel %vm536, %v494, 0
      %v556 = vsel %vm536, %v495, 0
      %v559 = vsel %vm536, %v496, 0
      %561 = vmatprep.subr.bf16.mxu0 0
      %562 = vmatpush1.bf16.msra.mxu0 0
      %563 = vmatprep.subr.bf16.mxu0 0
      %564 = vmatpush1.bf16.msra.mxu0 0
      %565 = vmatprep.subr.bf16.mxu0 0
      %566 = vmatpush1.bf16.msra.mxu0 0
      %567 = vmatprep.subr.bf16.mxu0 0
      %568 = vmatpush1.bf16.msra.mxu0 0
      %569 = vmatprep.subr.bf16.mxu0 0
      %570 = vmatpush1.bf16.msra.mxu0 %v531
      %571 = vmatprep.subr.bf16.mxu0 0
      %572 = vmatpush1.bf16.msra.mxu0 %v530
      %573 = vmatprep.subr.bf16.mxu0 0
      %574 = vmatpush1.bf16.msra.mxu0 %v529
      %575 = vmatprep.subr.bf16.mxu0 0
      %576 = vmatpush1.bf16.msra.mxu0 %v528
      %577 = vmatprep.subr.bf16.mxu0 0
      %578 = vmatpush2.bf16.msra.mxu0 0
      %579 = vmatprep.subr.bf16.mxu0 0
      %580 = vmatpush2.bf16.msra.mxu0 0
      %581 = vmatprep.subr.bf16.mxu0 0
      %582 = vmatpush2.bf16.msra.mxu0 0
      %583 = vmatprep.subr.bf16.mxu0 0
      %584 = vmatpush2.bf16.msra.mxu0 0
      %585 = vmatprep.subr.bf16.mxu0 0
      %586 = vmatpush2.bf16.msra.mxu0 0
      %587 = vmatprep.subr.bf16.mxu0 0
      %588 = vmatpush2.bf16.msra.mxu0 0
      %589 = vmatprep.subr.bf16.mxu0 0
      %590 = vmatpush2.bf16.msra.mxu0 0
      %591 = vmatprep.subr.bf16.mxu0 0
      %592 = vmatpush2.bf16.msra.mxu0 0
      %593 = vmatprep.mubr.bf16.mxu0 0
      %594 = vmatmul.mubr.bf16.gmra.mxu0 %v538
      %v595 = vpop.f32.mrf.mxu0
      %v596 = vadd.f32 %v510, %v595
      %v597 = vpop.f32.mrf.mxu0
      %v598 = vpop.f32.mrf.mxu0
      %v599 = vadd.f32 %v510, %v598
      %v600 = vpop.f32.mrf.mxu0
      %601 = vmatprep.mubr.bf16.mxu0 0
      %602 = vmatmul.mubr.bf16.gmra.mxu0 %v541
      %v603 = vpop.f32.mrf.mxu0
      %v604 = vadd.f32 %v510, %v603
      %v605 = vpop.f32.mrf.mxu0
      %v606 = vpop.f32.mrf.mxu0
      %v607 = vadd.f32 %v510, %v606
      %v608 = vpop.f32.mrf.mxu0
      %609 = vmatprep.mubr.bf16.mxu0 0
      %610 = vmatmul.mubr.bf16.gmra.mxu0 %v544
      %v611 = vpop.f32.mrf.mxu0
      %v612 = vadd.f32 %v510, %v611
      %v613 = vpop.f32.mrf.mxu0
      %v614 = vpop.f32.mrf.mxu0
      %v615 = vadd.f32 %v510, %v614
      %v616 = vpop.f32.mrf.mxu0
      %617 = vmatprep.mubr.bf16.mxu0 0
      %618 = vmatmul.mubr.bf16.gmra.mxu0 %v547
      %v619 = vpop.f32.mrf.mxu0
      %v620 = vadd.f32 %v510, %v619
      %v621 = vpop.f32.mrf.mxu0
      %v622 = vpop.f32.mrf.mxu0
      %v623 = vadd.f32 %v510, %v622
      %v624 = vpop.f32.mrf.mxu0
      %625 = vmatprep.mubr.bf16.mxu0 0
      %626 = vmatmul.mubr.bf16.gmra.mxu0 %v550
      %v627 = vpop.f32.mrf.mxu0
      %v628 = vadd.f32 %v510, %v627
      %v629 = vpop.f32.mrf.mxu0
      %v630 = vpop.f32.mrf.mxu0
      %v631 = vadd.f32 %v510, %v630
      %v632 = vpop.f32.mrf.mxu0
      %633 = vmatprep.mubr.bf16.mxu0 0
      %634 = vmatmul.mubr.bf16.gmra.mxu0 %v553
      %v635 = vpop.f32.mrf.mxu0
      %v636 = vadd.f32 %v510, %v635
      %v637 = vpop.f32.mrf.mxu0
      %v638 = vpop.f32.mrf.mxu0
      %v639 = vadd.f32 %v510, %v638
      %v640 = vpop.f32.mrf.mxu0
      %641 = vmatprep.mubr.bf16.mxu0 0
      %642 = vmatmul.mubr.bf16.gmra.mxu0 %v556
      %v643 = vpop.f32.mrf.mxu0
      %v644 = vadd.f32 %v510, %v643
      %v645 = vpop.f32.mrf.mxu0
      %v646 = vpop.f32.mrf.mxu0
      %v647 = vadd.f32 %v510, %v646
      %v648 = vpop.f32.mrf.mxu0
      %649 = vmatprep.mubr.bf16.mxu0 0
      %650 = vmatmul.mubr.bf16.gmra.mxu0 %v559
      %v651 = vpop.f32.mrf.mxu0
      %v652 = vadd.f32 %v510, %v651
      %v653 = vpop.f32.mrf.mxu0
      %v654 = vpop.f32.mrf.mxu0
      %v655 = vadd.f32 %v510, %v654
      %v656 = vpop.f32.mrf.mxu0
      %657 = vdwg.mxu0
      %v658 = vmax.f32 %v596, 0.0
      %v659 = vmax.f32 %v599, 0.0
      %v660 = vmax.f32 %v604, 0.0
      %v661 = vmax.f32 %v607, 0.0
      %v662 = vmax.f32 %v612, 0.0
      %v663 = vmax.f32 %v615, 0.0
      %v664 = vmax.f32 %v620, 0.0
      %v665 = vmax.f32 %v623, 0.0
      %v666 = vmax.f32 %v628, 0.0
      %v667 = vmax.f32 %v631, 0.0
      %v668 = vmax.f32 %v636, 0.0
      %v669 = vmax.f32 %v639, 0.0
      %v670 = vmax.f32 %v644, 0.0
      %v671 = vmax.f32 %v647, 0.0
      %v672 = vmax.f32 %v652, 0.0
      %v673 = vmax.f32 %v655, 0.0
      %v674 = vpack.c.bf16 %v659, %v658
      %v675 = vpack.c.bf16 %v661, %v660
      %v676 = vpack.c.bf16 %v663, %v662
      %v677 = vpack.c.bf16 %v665, %v664
      %v678 = vpack.c.bf16 %v667, %v666
      %v679 = vpack.c.bf16 %v669, %v668
      %v680 = vpack.c.bf16 %v671, %v670
      %v681 = vpack.c.bf16 %v673, %v672
      %v682 = vld [vmem:[%s5] sm:$0xf]
      %v683 = vld [vmem:[%s5 + $0x4] sm:$0xf]
      %v684 = vld [vmem:[%s5 + $0x8] sm:$0xf]
      %v685 = vld [vmem:[%s5 + $0xc] sm:$0xf]
      %v686 = vld [vmem:[%s6] sm:$0x1]
      %v688 = vlaneseq
      %v689 = vshrl.u32 %v688, 7
      %v690 = vsub.s32 0, %v689
      %v691 = vrot.slane %v686, %v690
      %v697 = vunpack.c.l.b16 %v682
      %v698 = vunpack.c.l.b16 %v683
      %v699 = vunpack.c.l.b16 %v684
      %v700 = vunpack.c.l.b16 %v685
      %v701 = vpack.c.b16 %v698, %v697
      %v702 = vpack.c.b16 %v700, %v699
      %vm705 = vcmask 261120
      %v707 = vsel %vm705, %v674, 0
      %v710 = vsel %vm705, %v675, 0
      %v713 = vsel %vm705, %v676, 0
      %v716 = vsel %vm705, %v677, 0
      %v719 = vsel %vm705, %v678, 0
      %v722 = vsel %vm705, %v679, 0
      %v725 = vsel %vm705, %v680, 0
      %v728 = vsel %vm705, %v681, 0
      %730 = vmatprep.subr.bf16.mxu0 0
      %731 = vmatpush1.bf16.msra.mxu0 0
      %732 = vmatprep.subr.bf16.mxu0 0
      %733 = vmatpush1.bf16.msra.mxu0 0
      %734 = vmatprep.subr.bf16.mxu0 0
      %735 = vmatpush1.bf16.msra.mxu0 0
      %736 = vmatprep.subr.bf16.mxu0 0
      %737 = vmatpush1.bf16.msra.mxu0 0
      %738 = vmatprep.subr.bf16.mxu0 0
      %739 = vmatpush1.bf16.msra.mxu0 0
      %740 = vmatprep.subr.bf16.mxu0 0
      %741 = vmatpush1.bf16.msra.mxu0 0
      %742 = vmatprep.subr.bf16.mxu0 0
      %743 = vmatpush1.bf16.msra.mxu0 %v702
      %744 = vmatprep.subr.bf16.mxu0 0
      %745 = vmatpush1.bf16.msra.mxu0 %v701
      %746 = vmatprep.subr.bf16.mxu0 0
      %747 = vmatpush2.bf16.msra.mxu0 0
      %748 = vmatprep.subr.bf16.mxu0 0
      %749 = vmatpush2.bf16.msra.mxu0 0
      %750 = vmatprep.subr.bf16.mxu0 0
      %751 = vmatpush2.bf16.msra.mxu0 0
      %752 = vmatprep.subr.bf16.mxu0 0
      %753 = vmatpush2.bf16.msra.mxu0 0
      %754 = vmatprep.subr.bf16.mxu0 0
      %755 = vmatpush2.bf16.msra.mxu0 0
      %756 = vmatprep.subr.bf16.mxu0 0
      %757 = vmatpush2.bf16.msra.mxu0 0
      %758 = vmatprep.subr.bf16.mxu0 0
      %759 = vmatpush2.bf16.msra.mxu0 0
      %760 = vmatprep.subr.bf16.mxu0 0
      %761 = vmatpush2.bf16.msra.mxu0 0
      %762 = vmatprep.mubr.bf16.mxu0 0
      %763 = vmatmul.mubr.bf16.gmra.mxu0 %v707
      %v764 = vpop.f32.mrf.mxu0
      %v765 = vadd.f32 %v691, %v764
      %v766 = vpop.f32.mrf.mxu0
      %v767 = vpop.f32.mrf.mxu0
      %v768 = vadd.f32 %v691, %v767
      %v769 = vpop.f32.mrf.mxu0
      %770 = vmatprep.mubr.bf16.mxu0 0
      %771 = vmatmul.mubr.bf16.gmra.mxu0 %v710
      %v772 = vpop.f32.mrf.mxu0
      %v773 = vadd.f32 %v691, %v772
      %v774 = vpop.f32.mrf.mxu0
      %v775 = vpop.f32.mrf.mxu0
      %v776 = vadd.f32 %v691, %v775
      %v777 = vpop.f32.mrf.mxu0
      %778 = vmatprep.mubr.bf16.mxu0 0
      %779 = vmatmul.mubr.bf16.gmra.mxu0 %v713
      %v780 = vpop.f32.mrf.mxu0
      %v781 = vadd.f32 %v691, %v780
      %v782 = vpop.f32.mrf.mxu0
      %v783 = vpop.f32.mrf.mxu0
      %v784 = vadd.f32 %v691, %v783
      %v785 = vpop.f32.mrf.mxu0
      %786 = vmatprep.mubr.bf16.mxu0 0
      %787 = vmatmul.mubr.bf16.gmra.mxu0 %v716
      %v788 = vpop.f32.mrf.mxu0
      %v789 = vadd.f32 %v691, %v788
      %v790 = vpop.f32.mrf.mxu0
      %v791 = vpop.f32.mrf.mxu0
      %v792 = vadd.f32 %v691, %v791
      %v793 = vpop.f32.mrf.mxu0
      %794 = vmatprep.mubr.bf16.mxu0 0
      %795 = vmatmul.mubr.bf16.gmra.mxu0 %v719
      %v796 = vpop.f32.mrf.mxu0
      %v797 = vadd.f32 %v691, %v796
      %v798 = vpop.f32.mrf.mxu0
      %v799 = vpop.f32.mrf.mxu0
      %v800 = vadd.f32 %v691, %v799
      %v801 = vpop.f32.mrf.mxu0
      %802 = vmatprep.mubr.bf16.mxu0 0
      %803 = vmatmul.mubr.bf16.gmra.mxu0 %v722
      %v804 = vpop.f32.mrf.mxu0
      %v805 = vadd.f32 %v691, %v804
      %v806 = vpop.f32.mrf.mxu0
      %v807 = vpop.f32.mrf.mxu0
      %v808 = vadd.f32 %v691, %v807
      %v809 = vpop.f32.mrf.mxu0
      %810 = vmatprep.mubr.bf16.mxu0 0
      %811 = vmatmul.mubr.bf16.gmra.mxu0 %v725
      %v812 = vpop.f32.mrf.mxu0
      %v813 = vadd.f32 %v691, %v812
      %v814 = vpop.f32.mrf.mxu0
      %v815 = vpop.f32.mrf.mxu0
      %v816 = vadd.f32 %v691, %v815
      %v817 = vpop.f32.mrf.mxu0
      %818 = vmatprep.mubr.bf16.mxu0 0
      %819 = vmatmul.mubr.bf16.gmra.mxu0 %v728
      %v820 = vpop.f32.mrf.mxu0
      %v821 = vadd.f32 %v691, %v820
      %v822 = vpop.f32.mrf.mxu0
      %v823 = vpop.f32.mrf.mxu0
      %v824 = vadd.f32 %v691, %v823
      %v825 = vpop.f32.mrf.mxu0
      %826 = vdwg.mxu0
      %827 = vmax.xlane.f32.xlu0 %v765
      %v828 = vpop.xlane.xlu0 %827
      %829 = vmax.xlane.f32.xlu0 %v768
      %v830 = vpop.xlane.xlu0 %829
      %831 = vmax.xlane.f32.xlu0 %v773
      %v832 = vpop.xlane.xlu0 %831
      %833 = vmax.xlane.f32.xlu0 %v776
      %v834 = vpop.xlane.xlu0 %833
      %835 = vmax.xlane.f32.xlu0 %v781
      %v836 = vpop.xlane.xlu0 %835
      %837 = vmax.xlane.f32.xlu0 %v784
      %v838 = vpop.xlane.xlu0 %837
      %839 = vmax.xlane.f32.xlu0 %v789
      %v840 = vpop.xlane.xlu0 %839
      %841 = vmax.xlane.f32.xlu0 %v792
      %v842 = vpop.xlane.xlu0 %841
      %843 = vmax.xlane.f32.xlu0 %v797
      %v844 = vpop.xlane.xlu0 %843
      %845 = vmax.xlane.f32.xlu0 %v800
      %v846 = vpop.xlane.xlu0 %845
      %847 = vmax.xlane.f32.xlu0 %v805
      %v848 = vpop.xlane.xlu0 %847
      %849 = vmax.xlane.f32.xlu0 %v808
      %v850 = vpop.xlane.xlu0 %849
      %851 = vmax.xlane.f32.xlu0 %v813
      %v852 = vpop.xlane.xlu0 %851
      %853 = vmax.xlane.f32.xlu0 %v816
      %v854 = vpop.xlane.xlu0 %853
      %855 = vmax.xlane.f32.xlu0 %v821
      %v856 = vpop.xlane.xlu0 %855
      %857 = vmax.xlane.f32.xlu0 %v824
      %v858 = vpop.xlane.xlu0 %857
      %v859 = vsub.f32 %v765, %v828
      %v860 = vsub.f32 %v768, %v830
      %v861 = vsub.f32 %v773, %v832
      %v862 = vsub.f32 %v776, %v834
      %v863 = vsub.f32 %v781, %v836
      %v864 = vsub.f32 %v784, %v838
      %v865 = vsub.f32 %v789, %v840
      %v866 = vsub.f32 %v792, %v842
      %v867 = vsub.f32 %v797, %v844
      %v868 = vsub.f32 %v800, %v846
      %v869 = vsub.f32 %v805, %v848
      %v870 = vsub.f32 %v808, %v850
      %v871 = vsub.f32 %v813, %v852
      %v872 = vsub.f32 %v816, %v854
      %v873 = vsub.f32 %v821, %v856
      %v874 = vsub.f32 %v824, %v858
      %v875 = vmul.f32 %v859, 1.442695
      %v876 = vpow.pop %v875
      %v877 = vmul.f32 %v860, 1.442695
      %v878 = vpow.pop %v877
      %v879 = vmul.f32 %v861, 1.442695
      %v880 = vpow.pop %v879
      %v881 = vmul.f32 %v862, 1.442695
      %v882 = vpow.pop %v881
      %v883 = vmul.f32 %v863, 1.442695
      %v884 = vpow.pop %v883
      %v885 = vmul.f32 %v864, 1.442695
      %v886 = vpow.pop %v885
      %v887 = vmul.f32 %v865, 1.442695
      %v888 = vpow.pop %v887
      %v889 = vmul.f32 %v866, 1.442695
      %v890 = vpow.pop %v889
      %v891 = vmul.f32 %v867, 1.442695
      %v892 = vpow.pop %v891
      %v893 = vmul.f32 %v868, 1.442695
      %v894 = vpow.pop %v893
      %v895 = vmul.f32 %v869, 1.442695
      %v896 = vpow.pop %v895
      %v897 = vmul.f32 %v870, 1.442695
      %v898 = vpow.pop %v897
      %v899 = vmul.f32 %v871, 1.442695
      %v900 = vpow.pop %v899
      %v901 = vmul.f32 %v872, 1.442695
      %v902 = vpow.pop %v901
      %v903 = vmul.f32 %v873, 1.442695
      %v904 = vpow.pop %v903
      %v905 = vmul.f32 %v874, 1.442695
      %v906 = vpow.pop %v905
      %907 = vadd.xlane.f32.xlu0 %v876
      %v908 = vpop.xlane.xlu0 %907
      %909 = vadd.xlane.f32.xlu0 %v878
      %v910 = vpop.xlane.xlu0 %909
      %911 = vadd.xlane.f32.xlu0 %v880
      %v912 = vpop.xlane.xlu0 %911
      %913 = vadd.xlane.f32.xlu0 %v882
      %v914 = vpop.xlane.xlu0 %913
      %915 = vadd.xlane.f32.xlu0 %v884
      %v916 = vpop.xlane.xlu0 %915
      %917 = vadd.xlane.f32.xlu0 %v886
      %v918 = vpop.xlane.xlu0 %917
      %919 = vadd.xlane.f32.xlu0 %v888
      %v920 = vpop.xlane.xlu0 %919
      %921 = vadd.xlane.f32.xlu0 %v890
      %v922 = vpop.xlane.xlu0 %921
      %923 = vadd.xlane.f32.xlu0 %v892
      %v924 = vpop.xlane.xlu0 %923
      %925 = vadd.xlane.f32.xlu0 %v894
      %v926 = vpop.xlane.xlu0 %925
      %927 = vadd.xlane.f32.xlu0 %v896
      %v928 = vpop.xlane.xlu0 %927
      %929 = vadd.xlane.f32.xlu0 %v898
      %v930 = vpop.xlane.xlu0 %929
      %931 = vadd.xlane.f32.xlu0 %v900
      %v932 = vpop.xlane.xlu0 %931
      %933 = vadd.xlane.f32.xlu0 %v902
      %v934 = vpop.xlane.xlu0 %933
      %935 = vadd.xlane.f32.xlu0 %v904
      %v936 = vpop.xlane.xlu0 %935
      %937 = vadd.xlane.f32.xlu0 %v906
      %v938 = vpop.xlane.xlu0 %937
      %v939 = vrcp.pop %v908
      %v940 = vrcp.pop %v910
      %v941 = vrcp.pop %v912
      %v942 = vrcp.pop %v914
      %v943 = vrcp.pop %v916
      %v944 = vrcp.pop %v918
      %v945 = vrcp.pop %v920
      %v946 = vrcp.pop %v922
      %v947 = vrcp.pop %v924
      %v948 = vrcp.pop %v926
      %v949 = vrcp.pop %v928
      %v950 = vrcp.pop %v930
      %v951 = vrcp.pop %v932
      %v952 = vrcp.pop %v934
      %v953 = vrcp.pop %v936
      %v954 = vrcp.pop %v938
      %v955 = vmul.f32 %v876, %v939
      %v956 = vmul.f32 %v878, %v940
      %v957 = vmul.f32 %v880, %v941
      %v958 = vmul.f32 %v882, %v942
      %v959 = vmul.f32 %v884, %v943
      %v960 = vmul.f32 %v886, %v944
      %v961 = vmul.f32 %v888, %v945
      %v962 = vmul.f32 %v890, %v946
      %v963 = vmul.f32 %v892, %v947
      %v964 = vmul.f32 %v894, %v948
      %v965 = vmul.f32 %v896, %v949
      %v966 = vmul.f32 %v898, %v950
      %v967 = vmul.f32 %v900, %v951
      %v968 = vmul.f32 %v902, %v952
      %v969 = vmul.f32 %v904, %v953
      %v970 = vmul.f32 %v906, %v954
      %971 = vst [vmem:[%s280] sm:$0xff] %v955
      %972 = vst [vmem:[%s280 + $0x8] sm:$0xff] %v956
      %973 = vst [vmem:[%s280 + $0x10] sm:$0xff] %v957
      %974 = vst [vmem:[%s280 + $0x18] sm:$0xff] %v958
      %975 = vst [vmem:[%s280 + $0x20] sm:$0xff] %v959
      %976 = vst [vmem:[%s280 + $0x28] sm:$0xff] %v960
      %977 = vst [vmem:[%s280 + $0x30] sm:$0xff] %v961
      %978 = vst [vmem:[%s280 + $0x38] sm:$0xff] %v962
      %979 = vst [vmem:[%s280 + $0x40] sm:$0xff] %v963
      %980 = vst [vmem:[%s280 + $0x48] sm:$0xff] %v964
      %981 = vst [vmem:[%s280 + $0x50] sm:$0xff] %v965
      %982 = vst [vmem:[%s280 + $0x58] sm:$0xff] %v966
      %983 = vst [vmem:[%s280 + $0x60] sm:$0xff] %v967
      %984 = vst [vmem:[%s280 + $0x68] sm:$0xff] %v968
      %985 = vst [vmem:[%s280 + $0x70] sm:$0xff] %v969
      %986 = vst [vmem:[%s280 + $0x78] sm:$0xff] %v970
      %s987 = smul.u32 16, %s18
      %p988 = scmp.lt.s32.totalorder %s987, 31
      %s989 = scalar_select %p988, %s987, 31
      %s990 = smul.addr %s989, 8
      %s991 = scalar_lea.vmem %s7, %s990
      // Predicated region
      $region49: #{simple_model_forward.1} parent=47 // pred_check
        %p992 = pneg %p188
      $region50: #{simple_model_forward.1} parent=47 // pred_check_branch
        %994 = sbr.rel (%p992) target = $region52
      $region51: #{simple_model_forward.1} parent=47 // pred_region
        %s995 = smul.u32 16, %s18
      $region52: #{simple_model_forward.1} parent=47 // pred_fallthru
        _
    $region48: #{simple_model_forward.1} parent=5 // pred_fallthru
      _
    %p996 = scmp.le.s32.totalorder 2, %s13
    // Predicated region
    $region53: #{simple_model_forward.1} parent=5 // pred_check
      %p997 = pneg %p996
    $region54: #{simple_model_forward.1} parent=5 // pred_check_branch
      %999 = sbr.rel (%p997) target = $region56
    $region55: #{simple_model_forward.1} parent=5 // pred_region
      %s1000 = ssub.s32 %s13, 2
      // Predicated region
      $region57: #{simple_model_forward.1} parent=55 // pred_check
        %p1001 = pneg %p194
      $region58: #{simple_model_forward.1} parent=55 // pred_check_branch
        %1003 = sbr.rel (%p1001) target = $region60
      $region59: #{simple_model_forward.1} parent=55 // pred_region
        %s1004 = smul.u32 16, %s19
        %p1005 = scmp.lt.s32.totalorder %s1004, 31
        %s1006 = scalar_select %p1005, %s1004, 31
        %s1007 = smul.addr %s1006, 8
        %s1008 = scalar_lea.vmem %s7, %s1007
      $region60: #{simple_model_forward.1} parent=55 // pred_fallthru
        _
    $region56: #{simple_model_forward.1} parent=5 // pred_fallthru
      _
  $region6: #{simple_model_forward.1} parent=0 // loop_footer
    %s17 = sadd.s32 1, %s13
  $region7: #{simple_model_forward.1} parent=0 // loop_footer_branch
    %12 = sbr.rel target = $region3
  $region8: #{simple_model_forward.1} parent=0 // loop_exit
    _

</llo_original>
